<compile_context>
chip_gen: v7x
topology: tpu7x:2x2x1
jax: 0.10.0
libtpu: 0.0.40
codegen_flags: <defaults>
</compile_context>

<pallas_src>
import jax
import jax.numpy as jnp
import numpy as np
from jax.experimental import pallas as pl
from jax.experimental.pallas import tpu as pltpu

_MAX_BATCH_TILE = 4096     # lane columns per grid step (f32; ~3.5 MiB VMEM/step)
_SINGLE_STEP_MAX = 1024    # at or below this batch size, use a single grid step


def net_kernel(cs_ref, x_ref, w1a_ref, w1b_ref, b1_ref, w2_ref, b2_ref, out_ref):
    # cs_ref : SMEM (6,) = [w00, w01, w10, w11, b0, b1]  (1x1-conv params)
    # x_ref  : VMEM (2, 9, TB)  -- channel, pixel, batch(lanes)
    x0 = x_ref[0]            # (9, TB)  input-channel-0 pixels
    x1 = x_ref[1]            # (9, TB)  input-channel-1 pixels

    # 1x1 conv + ReLU on the VPU (scalar-broadcast mul/add; no MXU hop).
    y0 = jnp.maximum(cs_ref[0] * x0 + cs_ref[1] * x1 + cs_ref[4], 0.0)
    y1 = jnp.maximum(cs_ref[2] * x0 + cs_ref[3] * x1 + cs_ref[5], 0.0)

    # fc1: two independent K=9 MXU dots (torch.flatten order: ch0 pix | ch1 pix).
    h = (jnp.dot(w1a_ref[...], y0, preferred_element_type=jnp.float32)
         + jnp.dot(w1b_ref[...], y1, preferred_element_type=jnp.float32)
         + b1_ref[...])
    h = jnp.maximum(h, 0.0)

    # fc2: (A, hidden) @ (hidden, TB) -> lane-dense (A, TB) store.
    out_ref[...] = (jnp.dot(w2_ref[...], h, preferred_element_type=jnp.float32)
                    + b2_ref[...])


def prepare_params(params):
    """One-time glue: torch-layout params -> kernel-layout operands.

    Call this when parameters are created/updated, NOT on the inference path.
    Weights are LHS operands in the kernel, so no transposes are needed.
    """
    wc = params["conv_w"].reshape(2, 2).astype(jnp.float32)   # (out_ch, in_ch)
    bc = params["conv_b"].astype(jnp.float32)                 # (2,)
    conv_s = jnp.concatenate([wc.reshape(4), bc])             # [w00,w01,w10,w11,b0,b1]

    fc1_w = params["fc1_w"].astype(jnp.float32)               # (hidden, 18) native
    hidden = fc1_w.shape[0]
    num_actions = params["fc2_w"].shape[0]
    return {
        "conv_s": conv_s,                                          # (6,)  -> SMEM
        "w1a": fc1_w[:, 0:9],                                      # (hidden, 9)
        "w1b": fc1_w[:, 9:18],                                     # (hidden, 9)
        "b1": params["fc1_b"].reshape(hidden, 1).astype(jnp.float32),
        "w2": params["fc2_w"].astype(jnp.float32),                 # (A, hidden) native
        "b2": params["fc2_b"].reshape(num_actions, 1).astype(jnp.float32),
    }


def _pick_batch_tile(B):
    if B <= _SINGLE_STEP_MAX:
        return B                      # one step; block equals full array extent
    # >= 2 grid steps so v7x megacore can shard the "parallel" batch axis;
    # lane-multiple tiles keep every store unmasked except the ragged tail.
    half = ((B + 1) // 2 + 127) // 128 * 128
    return min(_MAX_BATCH_TILE, half)


def net_forward(x_nchw, kp):
    """x_nchw: (B, 2, 3, 3) float32. kp: prepare_params(...). Returns (B, A)."""
    B = x_nchw.shape[0]
    hidden = kp["w1a"].shape[0]
    num_actions = kp["w2"].shape[0]

    # Feature-major, batch-on-lanes input slab: (channel, pixel, batch).
    x = jnp.transpose(x_nchw.reshape(B, 2, 9), (1, 2, 0)).astype(jnp.float32)

    tb = _pick_batch_tile(B)
    grid = (pl.cdiv(B, tb),)
    # No wrapper pad / slice: Pallas masks writes of the ragged last block, and
    # OOB garbage in the last x block only feeds masked-out output columns.

    flops = 2 * B * (2 * 2 * 9 + 18 * hidden + hidden * num_actions)
    bytes_accessed = 4 * (18 * B + num_actions * B
                          + 18 * hidden + hidden
                          + num_actions * hidden + num_actions + 6)

    const = lambda i: (0, 0)   # weights: same block every grid step -> stay resident
    out = pl.pallas_call(
        net_kernel,
        out_shape=jax.ShapeDtypeStruct((num_actions, B), jnp.float32),
        grid=grid,
        in_specs=[
            pl.BlockSpec(memory_space=pltpu.MemorySpace.SMEM),   # conv scalars (6,)
            pl.BlockSpec((2, 9, tb), lambda i: (0, 0, i)),       # x tile (pipelined)
            pl.BlockSpec((hidden, 9), const),                    # fc1 w, cols 0:9
            pl.BlockSpec((hidden, 9), const),                    # fc1 w, cols 9:18
            pl.BlockSpec((hidden, 1), const),                    # fc1 bias (column)
            pl.BlockSpec((num_actions, hidden), const),          # fc2 w
            pl.BlockSpec((num_actions, 1), const),               # fc2 bias (column)
        ],
        out_specs=pl.BlockSpec((num_actions, tb), lambda i: (0, i)),
        compiler_params=pltpu.CompilerParams(
            dimension_semantics=("parallel",)),
        cost_estimate=pl.CostEstimate(flops=flops, transcendentals=0,
                                      bytes_accessed=bytes_accessed),
    )(kp["conv_s"], x, kp["w1a"], kp["w1b"], kp["b1"], kp["w2"], kp["b2"])

    # Module semantics: (B, num_actions).  Layout plumbing only.
    return out.T


def init_params(key, num_actions=4, hidden=128):
    ks = jax.random.split(key, 6)

    def u(k, shape, fan_in):
        bound = 1.0 / np.sqrt(fan_in)
        return jax.random.uniform(k, shape, jnp.float32, -bound, bound)

    return {
        "conv_w": u(ks[0], (2, 2, 1, 1), 2),                # Conv2d(2, 2, 1)
        "conv_b": u(ks[1], (2,), 2),
        "fc1_w": u(ks[2], (hidden, 18), 18),                # Linear(18, hidden)
        "fc1_b": u(ks[3], (hidden,), 18),
        "fc2_w": u(ks[4], (num_actions, hidden), hidden),   # Linear(hidden, A)
        "fc2_b": u(ks[5], (num_actions,), hidden),
    }


def net_forward_ref(x_nchw, params):
    """Pure-JAX reference (torch-layout params) for correctness checking."""
    B = x_nchw.shape[0]
    wc = params["conv_w"].reshape(2, 2)
    y = jnp.einsum("oc,bchw->bohw", wc, x_nchw) + params["conv_b"][None, :, None, None]
    y = jnp.maximum(y, 0.0)
    flat = y.reshape(B, -1)
    h = jnp.maximum(flat @ params["fc1_w"].T + params["fc1_b"], 0.0)
    return h @ params["fc2_w"].T + params["fc2_b"]


if __name__ == "__main__":
    key = jax.random.PRNGKey(0)
    k_param, k_x1, k_x2 = jax.random.split(key, 3)

    num_actions, hidden = 4, 128
    params = init_params(k_param, num_actions=num_actions, hidden=hidden)
    kparams = prepare_params(params)        # one-time weight re-layout

    fwd = jax.jit(net_forward)

    # Small-shape check (matches the module's input_state = (2, 3, 3), NCHW).
    x_small = jax.random.normal(k_x1, (2, 2, 3, 3), jnp.float32)
    q_small = jax.block_until_ready(fwd(x_small, kparams))
    np.testing.assert_allclose(np.asarray(q_small),
                               np.asarray(net_forward_ref(x_small, params)),
                               rtol=1e-5, atol=1e-5)

    # Larger batch exercising the multi-step grid AND the ragged tail block
    # (1537 = 2 steps of 896 with a masked partial last block).
    x_big = jax.random.normal(k_x2, (1537, 2, 3, 3), jnp.float32)
    q_big = jax.block_until_ready(fwd(x_big, kparams))
    np.testing.assert_allclose(np.asarray(q_big),
                               np.asarray(net_forward_ref(x_big, params)),
                               rtol=1e-5, atol=1e-5)

    print("KERNEL_OK")
</pallas_src>

<mosaic_0001>
module attributes {stable_mosaic.version = 11 : i64} {
  func.func @net_kernel(%arg0: i32, %arg1: memref<6xf32, #tpu.memory_space<smem>>, %arg2: memref<2x9x2xf32, #tpu.memory_space<vmem>>, %arg3: memref<128x9xf32, #tpu.memory_space<vmem>>, %arg4: memref<128x9xf32, #tpu.memory_space<vmem>>, %arg5: memref<128x1xf32, #tpu.memory_space<vmem>>, %arg6: memref<4x128xf32, #tpu.memory_space<vmem>>, %arg7: memref<4x1xf32, #tpu.memory_space<vmem>>, %arg8: memref<4x2xf32, #tpu.memory_space<vmem>>) attributes {dimension_semantics = [#tpu.dimension_semantics<parallel>], iteration_bounds = array<i64: 1>, scalar_prefetch = 0 : i64, scratch_operands = 0 : i64, tpu.core_type = #tpu.core_type<tc>, window_params = [{transform_indices = @transform_0, window_bounds = array<i64: 6>}, {transform_indices = @transform_1, window_bounds = array<i64: 2, 9, 2>}, {pipeline_mode = #tpu.pipeline_mode<synchronous>, transform_indices = @transform_2, window_bounds = array<i64: 128, 9>}, {pipeline_mode = #tpu.pipeline_mode<synchronous>, transform_indices = @transform_3, window_bounds = array<i64: 128, 9>}, {pipeline_mode = #tpu.pipeline_mode<synchronous>, transform_indices = @transform_4, window_bounds = array<i64: 128, 1>}, {pipeline_mode = #tpu.pipeline_mode<synchronous>, transform_indices = @transform_5, window_bounds = array<i64: 4, 128>}, {pipeline_mode = #tpu.pipeline_mode<synchronous>, transform_indices = @transform_6, window_bounds = array<i64: 4, 1>}, {transform_indices = @transform_7, window_bounds = array<i64: 4, 2>}]} {
    %c0 = arith.constant 0 : index
    %c0_0 = arith.constant 0 : index
    %c0_1 = arith.constant 0 : index
    %0 = vector.load %arg2[%c0, %c0_0, %c0_1] : memref<2x9x2xf32, #tpu.memory_space<vmem>>, vector<1x9x2xf32>
    %1 = vector.shape_cast %0 : vector<1x9x2xf32> to vector<9x2xf32>
    %c1 = arith.constant 1 : index
    %c0_2 = arith.constant 0 : index
    %c0_3 = arith.constant 0 : index
    %2 = vector.load %arg2[%c1, %c0_2, %c0_3] : memref<2x9x2xf32, #tpu.memory_space<vmem>>, vector<1x9x2xf32>
    %3 = vector.shape_cast %2 : vector<1x9x2xf32> to vector<9x2xf32>
    %c0_4 = arith.constant 0 : index
    %4 = memref.load %arg1[%c0_4] : memref<6xf32, #tpu.memory_space<smem>>
    %5 = vector.broadcast %4 : f32 to vector<9x2xf32>
    %6 = arith.mulf %5, %1 : vector<9x2xf32>
    %c1_5 = arith.constant 1 : index
    %7 = memref.load %arg1[%c1_5] : memref<6xf32, #tpu.memory_space<smem>>
    %8 = vector.broadcast %7 : f32 to vector<9x2xf32>
    %9 = arith.mulf %8, %3 : vector<9x2xf32>
    %10 = arith.addf %6, %9 : vector<9x2xf32>
    %c4 = arith.constant 4 : index
    %11 = memref.load %arg1[%c4] : memref<6xf32, #tpu.memory_space<smem>>
    %12 = vector.broadcast %11 : f32 to vector<9x2xf32>
    %13 = arith.addf %10, %12 : vector<9x2xf32>
    %cst = arith.constant 0.000000e+00 : f32
    %14 = vector.broadcast %cst : f32 to vector<9x2xf32>
    %15 = arith.maximumf %13, %14 : vector<9x2xf32>
    %c2 = arith.constant 2 : index
    %16 = memref.load %arg1[%c2] : memref<6xf32, #tpu.memory_space<smem>>
    %17 = vector.broadcast %16 : f32 to vector<9x2xf32>
    %18 = arith.mulf %17, %1 : vector<9x2xf32>
    %c3 = arith.constant 3 : index
    %19 = memref.load %arg1[%c3] : memref<6xf32, #tpu.memory_space<smem>>
    %20 = vector.broadcast %19 : f32 to vector<9x2xf32>
    %21 = arith.mulf %20, %3 : vector<9x2xf32>
    %22 = arith.addf %18, %21 : vector<9x2xf32>
    %c5 = arith.constant 5 : index
    %23 = memref.load %arg1[%c5] : memref<6xf32, #tpu.memory_space<smem>>
    %24 = vector.broadcast %23 : f32 to vector<9x2xf32>
    %25 = arith.addf %22, %24 : vector<9x2xf32>
    %cst_6 = arith.constant 0.000000e+00 : f32
    %26 = vector.broadcast %cst_6 : f32 to vector<9x2xf32>
    %27 = arith.maximumf %25, %26 : vector<9x2xf32>
    %c0_7 = arith.constant 0 : index
    %c0_8 = arith.constant 0 : index
    %28 = vector.load %arg3[%c0_7, %c0_8] : memref<128x9xf32, #tpu.memory_space<vmem>>, vector<128x9xf32>
    %cst_9 = arith.constant dense<0.000000e+00> : vector<128x2xf32>
    %29 = tpu.matmul %28, %15, %cst_9 {dimension_numbers = #tpu.dot_dimension_numbers<[1], [0], [0], [1], [0, 0, 1, 1], [], []>} : vector<128x9xf32>, vector<9x2xf32>, vector<128x2xf32> -> vector<128x2xf32>
    %c0_10 = arith.constant 0 : index
    %c0_11 = arith.constant 0 : index
    %30 = vector.load %arg4[%c0_10, %c0_11] : memref<128x9xf32, #tpu.memory_space<vmem>>, vector<128x9xf32>
    %cst_12 = arith.constant dense<0.000000e+00> : vector<128x2xf32>
    %31 = tpu.matmul %30, %27, %cst_12 {dimension_numbers = #tpu.dot_dimension_numbers<[1], [0], [0], [1], [0, 0, 1, 1], [], []>} : vector<128x9xf32>, vector<9x2xf32>, vector<128x2xf32> -> vector<128x2xf32>
    %32 = arith.addf %29, %31 : vector<128x2xf32>
    %c0_13 = arith.constant 0 : index
    %c0_14 = arith.constant 0 : index
    %33 = vector.load %arg5[%c0_13, %c0_14] : memref<128x1xf32, #tpu.memory_space<vmem>>, vector<128x1xf32>
    %34 = vector.broadcast %33 : vector<128x1xf32> to vector<128x2xf32>
    %35 = arith.addf %32, %34 : vector<128x2xf32>
    %cst_15 = arith.constant 0.000000e+00 : f32
    %36 = vector.broadcast %cst_15 : f32 to vector<128x2xf32>
    %37 = arith.maximumf %35, %36 : vector<128x2xf32>
    %c0_16 = arith.constant 0 : index
    %c0_17 = arith.constant 0 : index
    %38 = vector.load %arg6[%c0_16, %c0_17] : memref<4x128xf32, #tpu.memory_space<vmem>>, vector<4x128xf32>
    %cst_18 = arith.constant dense<0.000000e+00> : vector<4x2xf32>
    %39 = tpu.matmul %38, %37, %cst_18 {dimension_numbers = #tpu.dot_dimension_numbers<[1], [0], [0], [1], [0, 0, 1, 1], [], []>} : vector<4x128xf32>, vector<128x2xf32>, vector<4x2xf32> -> vector<4x2xf32>
    %c0_19 = arith.constant 0 : index
    %c0_20 = arith.constant 0 : index
    %40 = vector.load %arg7[%c0_19, %c0_20] : memref<4x1xf32, #tpu.memory_space<vmem>>, vector<4x1xf32>
    %41 = vector.broadcast %40 : vector<4x1xf32> to vector<4x2xf32>
    %42 = arith.addf %39, %41 : vector<4x2xf32>
    %c0_21 = arith.constant 0 : index
    %c0_22 = arith.constant 0 : index
    %43 = vector.load %arg8[%c0_21, %c0_22] : memref<4x2xf32, #tpu.memory_space<vmem>>, vector<4x2xf32>
    tpu.vector_store %arg8[%c0_21, %c0_22], %42 {strides = array<i32>} : memref<4x2xf32, #tpu.memory_space<vmem>>, vector<4x2xf32>,
    return
  }
  func.func @transform_0(%arg0: i32) -> i32 {
    %c0_i32 = arith.constant 0 : i32
    %c0_i32_0 = arith.constant 0 : i32
    return %c0_i32 : i32
  }
  func.func @transform_1(%arg0: i32) -> (i32, i32, i32) {
    %c0_i32 = arith.constant 0 : i32
    %c0_i32_0 = arith.constant 0 : i32
    %c0_i32_1 = arith.constant 0 : i32
    return %c0_i32, %c0_i32_0, %arg0 : i32, i32, i32
  }
  func.func @transform_2(%arg0: i32) -> (i32, i32) {
    %c0_i32 = arith.constant 0 : i32
    %c0_i32_0 = arith.constant 0 : i32
    %c0_i32_1 = arith.constant 0 : i32
    return %c0_i32, %c0_i32_0 : i32, i32
  }
  func.func @transform_3(%arg0: i32) -> (i32, i32) {
    %c0_i32 = arith.constant 0 : i32
    %c0_i32_0 = arith.constant 0 : i32
    %c0_i32_1 = arith.constant 0 : i32
    return %c0_i32, %c0_i32_0 : i32, i32
  }
  func.func @transform_4(%arg0: i32) -> (i32, i32) {
    %c0_i32 = arith.constant 0 : i32
    %c0_i32_0 = arith.constant 0 : i32
    %c0_i32_1 = arith.constant 0 : i32
    return %c0_i32, %c0_i32_0 : i32, i32
  }
  func.func @transform_5(%arg0: i32) -> (i32, i32) {
    %c0_i32 = arith.constant 0 : i32
    %c0_i32_0 = arith.constant 0 : i32
    %c0_i32_1 = arith.constant 0 : i32
    return %c0_i32, %c0_i32_0 : i32, i32
  }
  func.func @transform_6(%arg0: i32) -> (i32, i32) {
    %c0_i32 = arith.constant 0 : i32
    %c0_i32_0 = arith.constant 0 : i32
    %c0_i32_1 = arith.constant 0 : i32
    return %c0_i32, %c0_i32_0 : i32, i32
  }
  func.func @transform_7(%arg0: i32) -> (i32, i32) {
    %c0_i32 = arith.constant 0 : i32
    %c0_i32_0 = arith.constant 0 : i32
    return %c0_i32, %arg0 : i32, i32
  }
}

</mosaic_0001>

<llo_original>
// kernel: net_forward.1
$region0: #{net_forward.1}
  #allocation0 [shape = 'u32[]', space=smem, size = 0x4, offset = 0x4, fixed_abs, tag = 'smem constant byte address 0x4 - core index']
  #allocation1 [shape = 'u32[144,128]{1,0:T(1,128)}', space=vmem, size = 0x12000, scoped, tag = 'internal scratch']
  %s0 = inlined_call_operand.vmem [shape: f32[6], index: 0, kind: input, shape index: {}]
  %s1 = inlined_call_operand.vmem [shape: f32[2,9,2], index: 1, kind: input, shape index: {}]
  %s2 = inlined_call_operand.vmem [shape: f32[128,9], index: 2, kind: input, shape index: {}]
  %s3 = inlined_call_operand.vmem [shape: f32[128,9], index: 3, kind: input, shape index: {}]
  %s4 = inlined_call_operand.vmem [shape: f32[128,1], index: 4, kind: input, shape index: {}]
  %s5 = inlined_call_operand.vmem [shape: f32[4,128], index: 5, kind: input, shape index: {}]
  %s6 = inlined_call_operand.vmem [shape: f32[4,1], index: 6, kind: input, shape index: {}]
  %s7 = inlined_call_operand.vmem [shape: f32[4,2], index: 7, kind: output, shape index: {}]
  %s8 = sld [smem:[#allocation0]]
  $region42: #{net_forward.1} parent=0
    _
  %s10 = ssub.s32 1, %s8
  %s11 = scalar_select 0, %s10, %s8
  $region1: #{net_forward.1} parent=0
    #allocation2 [shape = 'u8[512]{0}', space=smem, size = 0x200, scoped, tag = 'input window, operand 0, single buffered']
    #allocation3 [shape = 's32[1]{0}', space=sflag, size = 0x4, scoped, tag = 'scoped memory for net_forward.1']
    %12 = vsyncpa [#allocation3], 0
    // Predicated region
    $region2: #{net_forward.1} parent=1 // pred_check
      _
    $region3: #{net_forward.1} parent=1 // pred_check_branch
      %14 = sbr.rel (0) target = $region5
    $region4: #{net_forward.1} parent=1 // pred_region
      %s16 = ssub.s32 16, 16
      %17 = vsyncadd [#allocation3], %s16
      %s19 = sshll.u32 %s0, 4
      %s20 = int_to_ptr.vmem [resolvable:$true] %s19
      %22 = dma.vmem_to_smem %s20, 16, [#allocation2], [#allocation3]
    $region5: #{net_forward.1} parent=1 // pred_fallthru
      _
    // Predicated region
    $region6: #{net_forward.1} parent=1 // pred_check
      _
    $region7: #{net_forward.1} parent=1 // pred_check_branch
      %24 = sbr.rel (0) target = $region9
    $region8: #{net_forward.1} parent=1 // pred_region
      _
    $region9: #{net_forward.1} parent=1 // pred_fallthru
      _
    // Predicated region
    $region10: #{net_forward.1} parent=1 // pred_check
      _
    $region11: #{net_forward.1} parent=1 // pred_check_branch
      %26 = sbr.rel (0) target = $region13
    $region12: #{net_forward.1} parent=1 // pred_region
      _
    $region13: #{net_forward.1} parent=1 // pred_fallthru
      _
    // Predicated region
    $region14: #{net_forward.1} parent=1 // pred_check
      _
    $region15: #{net_forward.1} parent=1 // pred_check_branch
      %28 = sbr.rel (0) target = $region17
    $region16: #{net_forward.1} parent=1 // pred_region
      _
    $region17: #{net_forward.1} parent=1 // pred_fallthru
      _
    // Predicated region
    $region18: #{net_forward.1} parent=1 // pred_check
      _
    $region19: #{net_forward.1} parent=1 // pred_check_branch
      %30 = sbr.rel (0) target = $region21
    $region20: #{net_forward.1} parent=1 // pred_region
      _
    $region21: #{net_forward.1} parent=1 // pred_fallthru
      _
    // Predicated region
    $region22: #{net_forward.1} parent=1 // pred_check
      _
    $region23: #{net_forward.1} parent=1 // pred_check_branch
      %32 = sbr.rel (0) target = $region25
    $region24: #{net_forward.1} parent=1 // pred_region
      _
    $region25: #{net_forward.1} parent=1 // pred_fallthru
      _
    // Predicated region
    $region26: #{net_forward.1} parent=1 // pred_check
      _
    $region27: #{net_forward.1} parent=1 // pred_check_branch
      %34 = sbr.rel (0) target = $region29
    $region28: #{net_forward.1} parent=1 // pred_region
      _
    $region29: #{net_forward.1} parent=1 // pred_fallthru
      _
    // Predicated region
    $region30: #{net_forward.1} parent=1 // pred_check
      _
    $region31: #{net_forward.1} parent=1 // pred_check_branch
      %36 = sbr.rel (0) target = $region33
    $region32: #{net_forward.1} parent=1 // pred_region
      %37 = dma.done [#allocation3], 16
    $region33: #{net_forward.1} parent=1 // pred_fallthru
      _
    %38 = sfence
    %v39 = vld [vmem:[%s1] sm:$0xff]
    %v40 = vld [vmem:[%s1 + $0x8] sm:$0x1]
    %s41 = scalar_lea.vmem %s1, 16
    %v42 = vld [vmem:[%s41] sm:$0xff]
    %v43 = vld [vmem:[%s41 + $0x8] sm:$0x1]
    %s44 = sld [smem:[#allocation2]]
    %v45 = vstv %s44
    %v46 = vmul.f32 %v45, %v39
    %v47 = vmul.f32 %v45, %v40
    %s48 = sld [smem:[#allocation2 + $0x1]]
    %v49 = vstv %s48
    %v50 = vmul.f32 %v49, %v42
    %v51 = vmul.f32 %v49, %v43
    %v52 = vadd.f32 %v46, %v50
    %v53 = vadd.f32 %v47, %v51
    %s54 = sld [smem:[#allocation2 + $0x4]]
    %v55 = vstv %s54
    %v56 = vadd.f32 %v52, %v55
    %v57 = vadd.f32 %v53, %v55
    %v58 = vmax.f32 %v56, 0.0
    %v59 = vmax.f32 %v57, 0.0
    %s60 = sld [smem:[#allocation2 + $0x2]]
    %v61 = vstv %s60
    %v62 = vmul.f32 %v61, %v39
    %v63 = vmul.f32 %v61, %v40
    %s64 = sld [smem:[#allocation2 + $0x3]]
    %v65 = vstv %s64
    %v66 = vmul.f32 %v65, %v42
    %v67 = vmul.f32 %v65, %v43
    %v68 = vadd.f32 %v62, %v66
    %v69 = vadd.f32 %v63, %v67
    %s70 = sld [smem:[#allocation2 + $0x5]]
    %v71 = vstv %s70
    %v72 = vadd.f32 %v68, %v71
    %v73 = vadd.f32 %v69, %v71
    %v74 = vmax.f32 %v72, 0.0
    %v75 = vmax.f32 %v73, 0.0
    %v76 = vld [vmem:[%s2] sm:$0xff]
    %v77 = vld [vmem:[%s2 + $0x8] sm:$0xff]
    %v78 = vld [vmem:[%s2 + $0x10] sm:$0xff]
    %v79 = vld [vmem:[%s2 + $0x18] sm:$0xff]
    %v80 = vld [vmem:[%s2 + $0x20] sm:$0xff]
    %v81 = vld [vmem:[%s2 + $0x28] sm:$0xff]
    %v82 = vld [vmem:[%s2 + $0x30] sm:$0xff]
    %v83 = vld [vmem:[%s2 + $0x38] sm:$0xff]
    %v84 = vld [vmem:[%s2 + $0x40] sm:$0xff]
    %v85 = vld [vmem:[%s2 + $0x48] sm:$0xff]
    %v86 = vld [vmem:[%s2 + $0x50] sm:$0xff]
    %v87 = vld [vmem:[%s2 + $0x58] sm:$0xff]
    %v88 = vld [vmem:[%s2 + $0x60] sm:$0xff]
    %v89 = vld [vmem:[%s2 + $0x68] sm:$0xff]
    %v90 = vld [vmem:[%s2 + $0x70] sm:$0xff]
    %v91 = vld [vmem:[%s2 + $0x78] sm:$0xff]
    %v92 = vld [vmem:[%s3] sm:$0xff]
    %v93 = vld [vmem:[%s3 + $0x8] sm:$0xff]
    %v94 = vld [vmem:[%s3 + $0x10] sm:$0xff]
    %v95 = vld [vmem:[%s3 + $0x18] sm:$0xff]
    %v96 = vld [vmem:[%s3 + $0x20] sm:$0xff]
    %v97 = vld [vmem:[%s3 + $0x28] sm:$0xff]
    %v98 = vld [vmem:[%s3 + $0x30] sm:$0xff]
    %v99 = vld [vmem:[%s3 + $0x38] sm:$0xff]
    %v100 = vld [vmem:[%s3 + $0x40] sm:$0xff]
    %v101 = vld [vmem:[%s3 + $0x48] sm:$0xff]
    %v102 = vld [vmem:[%s3 + $0x50] sm:$0xff]
    %v103 = vld [vmem:[%s3 + $0x58] sm:$0xff]
    %v104 = vld [vmem:[%s3 + $0x60] sm:$0xff]
    %v105 = vld [vmem:[%s3 + $0x68] sm:$0xff]
    %v106 = vld [vmem:[%s3 + $0x70] sm:$0xff]
    %v107 = vld [vmem:[%s3 + $0x78] sm:$0xff]
    %vm108 = vcmask 72704
    %v110 = vsel %vm108, %v92, 0
    %v113 = vsel %vm108, %v93, 0
    %v116 = vsel %vm108, %v94, 0
    %v119 = vsel %vm108, %v95, 0
    %v122 = vsel %vm108, %v96, 0
    %v125 = vsel %vm108, %v97, 0
    %v128 = vsel %vm108, %v98, 0
    %v131 = vsel %vm108, %v99, 0
    %v134 = vsel %vm108, %v100, 0
    %v137 = vsel %vm108, %v101, 0
    %v140 = vsel %vm108, %v102, 0
    %v143 = vsel %vm108, %v103, 0
    %v146 = vsel %vm108, %v104, 0
    %v149 = vsel %vm108, %v105, 0
    %v152 = vsel %vm108, %v106, 0
    %v155 = vsel %vm108, %v107, 0
    %vm157 = vcmask 1040384
    %v159 = vsel %vm157, %v75, 0
    %161 = vmatprep.subr.mxu0 0.0
    %162 = vmatpush1.msra.mxu0 %v74
    %163 = vmatprep.subr.mxu0 0.0
    %164 = vmatpush1.msra.mxu0 %v159
    %165 = vmatprep.subr.mxu0 0.0
    %166 = vmatpush1.msra.mxu0 0.0
    %167 = vmatprep.subr.mxu0 0.0
    %168 = vmatpush1.msra.mxu0 0.0
    %169 = vmatprep.subr.mxu0 0.0
    %170 = vmatpush1.msra.mxu0 0.0
    %171 = vmatprep.subr.mxu0 0.0
    %172 = vmatpush1.msra.mxu0 0.0
    %173 = vmatprep.subr.mxu0 0.0
    %174 = vmatpush1.msra.mxu0 0.0
    %175 = vmatprep.subr.mxu0 0.0
    %176 = vmatpush1.msra.mxu0 0.0
    %177 = vmatprep.subr.mxu0 0.0
    %178 = vmatpush1.msra.mxu0 0.0
    %179 = vmatprep.subr.mxu0 0.0
    %180 = vmatpush1.msra.mxu0 0.0
    %181 = vmatprep.subr.mxu0 0.0
    %182 = vmatpush1.msra.mxu0 0.0
    %183 = vmatprep.subr.mxu0 0.0
    %184 = vmatpush1.msra.mxu0 0.0
    %185 = vmatprep.subr.mxu0 0.0
    %186 = vmatpush1.msra.mxu0 0.0
    %187 = vmatprep.subr.mxu0 0.0
    %188 = vmatpush1.msra.mxu0 0.0
    %189 = vmatprep.subr.mxu0 0.0
    %190 = vmatpush1.msra.mxu0 0.0
    %191 = vmatprep.subr.mxu0 0.0
    %192 = vmatpush1.msra.mxu0 0.0
    %193 = vmatprep.subr.mxu0 0.0
    %194 = vmatpush1.msra.mxu0 0.0
    %195 = vmatprep.subr.mxu0 0.0
    %196 = vmatpush1.msra.mxu0 0.0
    %197 = vmatprep.subr.mxu0 0.0
    %198 = vmatpush1.msra.mxu0 0.0
    %199 = vmatprep.subr.mxu0 0.0
    %200 = vmatpush1.msra.mxu0 0.0
    %201 = vmatprep.subr.mxu0 0.0
    %202 = vmatpush1.msra.mxu0 0.0
    %203 = vmatprep.subr.mxu0 0.0
    %204 = vmatpush1.msra.mxu0 0.0
    %205 = vmatprep.subr.mxu0 0.0
    %206 = vmatpush1.msra.mxu0 0.0
    %207 = vmatprep.subr.mxu0 0.0
    %208 = vmatpush1.msra.mxu0 0.0
    %209 = vmatprep.subr.mxu0 0.0
    %210 = vmatpush1.msra.mxu0 0.0
    %211 = vmatprep.subr.mxu0 0.0
    %212 = vmatpush1.msra.mxu0 0.0
    %213 = vmatprep.subr.mxu0 0.0
    %214 = vmatpush1.msra.mxu0 0.0
    %215 = vmatprep.subr.mxu0 0.0
    %216 = vmatpush1.msra.mxu0 0.0
    %217 = vmatprep.subr.mxu0 0.0
    %218 = vmatpush1.msra.mxu0 0.0
    %219 = vmatprep.subr.mxu0 0.0
    %220 = vmatpush1.msra.mxu0 0.0
    %221 = vmatprep.subr.mxu0 0.0
    %222 = vmatpush1.msra.mxu0 0.0
    %223 = vmatprep.subr.mxu0 0.0
    %224 = vmatpush1.msra.mxu0 0.0
    %225 = vmatprep.mubr.f32.mxu0 0.0
    %226 = vmatmul.mubr.f32.gmra.mrb[0].mxu0 %v110
    %v227 = vpop.f32.mrb[0].mxu0
    %v228 = vadd.f32 0.0, %v227
    %v229 = vpop.f32.mrb[0].mxu0
    %230 = vmatprep.mubr.f32.mxu0 0.0
    %231 = vmatmul.mubr.f32.gmra.mrb[0].mxu0 %v113
    %v232 = vpop.f32.mrb[0].mxu0
    %v233 = vadd.f32 0.0, %v232
    %v234 = vpop.f32.mrb[0].mxu0
    %235 = vmatprep.mubr.f32.mxu0 0.0
    %236 = vmatmul.mubr.f32.gmra.mrb[0].mxu0 %v116
    %v237 = vpop.f32.mrb[0].mxu0
    %v238 = vadd.f32 0.0, %v237
    %v239 = vpop.f32.mrb[0].mxu0
    %240 = vmatprep.mubr.f32.mxu0 0.0
    %241 = vmatmul.mubr.f32.gmra.mrb[0].mxu0 %v119
    %v242 = vpop.f32.mrb[0].mxu0
    %v243 = vadd.f32 0.0, %v242
    %v244 = vpop.f32.mrb[0].mxu0
    %245 = vmatprep.mubr.f32.mxu0 0.0
    %246 = vmatmul.mubr.f32.gmra.mrb[0].mxu0 %v122
    %v247 = vpop.f32.mrb[0].mxu0
    %v248 = vadd.f32 0.0, %v247
    %v249 = vpop.f32.mrb[0].mxu0
    %250 = vmatprep.mubr.f32.mxu0 0.0
    %251 = vmatmul.mubr.f32.gmra.mrb[0].mxu0 %v125
    %v252 = vpop.f32.mrb[0].mxu0
    %v253 = vadd.f32 0.0, %v252
    %v254 = vpop.f32.mrb[0].mxu0
    %255 = vmatprep.mubr.f32.mxu0 0.0
    %256 = vmatmul.mubr.f32.gmra.mrb[0].mxu0 %v128
    %v257 = vpop.f32.mrb[0].mxu0
    %v258 = vadd.f32 0.0, %v257
    %v259 = vpop.f32.mrb[0].mxu0
    %260 = vmatprep.mubr.f32.mxu0 0.0
    %261 = vmatmul.mubr.f32.gmra.mrb[0].mxu0 %v131
    %v262 = vpop.f32.mrb[0].mxu0
    %v263 = vadd.f32 0.0, %v262
    %v264 = vpop.f32.mrb[0].mxu0
    %265 = vmatprep.mubr.f32.mxu0 0.0
    %266 = vmatmul.mubr.f32.gmra.mrb[0].mxu0 %v134
    %v267 = vpop.f32.mrb[0].mxu0
    %v268 = vadd.f32 0.0, %v267
    %v269 = vpop.f32.mrb[0].mxu0
    %270 = vmatprep.mubr.f32.mxu0 0.0
    %271 = vmatmul.mubr.f32.gmra.mrb[0].mxu0 %v137
    %v272 = vpop.f32.mrb[0].mxu0
    %v273 = vadd.f32 0.0, %v272
    %v274 = vpop.f32.mrb[0].mxu0
    %275 = vmatprep.mubr.f32.mxu0 0.0
    %276 = vmatmul.mubr.f32.gmra.mrb[0].mxu0 %v140
    %v277 = vpop.f32.mrb[0].mxu0
    %v278 = vadd.f32 0.0, %v277
    %v279 = vpop.f32.mrb[0].mxu0
    %280 = vmatprep.mubr.f32.mxu0 0.0
    %281 = vmatmul.mubr.f32.gmra.mrb[0].mxu0 %v143
    %v282 = vpop.f32.mrb[0].mxu0
    %v283 = vadd.f32 0.0, %v282
    %v284 = vpop.f32.mrb[0].mxu0
    %285 = vmatprep.mubr.f32.mxu0 0.0
    %286 = vmatmul.mubr.f32.gmra.mrb[0].mxu0 %v146
    %v287 = vpop.f32.mrb[0].mxu0
    %v288 = vadd.f32 0.0, %v287
    %v289 = vpop.f32.mrb[0].mxu0
    %290 = vmatprep.mubr.f32.mxu0 0.0
    %291 = vmatmul.mubr.f32.gmra.mrb[0].mxu0 %v149
    %v292 = vpop.f32.mrb[0].mxu0
    %v293 = vadd.f32 0.0, %v292
    %v294 = vpop.f32.mrb[0].mxu0
    %295 = vmatprep.mubr.f32.mxu0 0.0
    %296 = vmatmul.mubr.f32.gmra.mrb[0].mxu0 %v152
    %v297 = vpop.f32.mrb[0].mxu0
    %v298 = vadd.f32 0.0, %v297
    %v299 = vpop.f32.mrb[0].mxu0
    %300 = vmatprep.mubr.f32.mxu0 0.0
    %301 = vmatmul.mubr.f32.gmra.mrb[0].mxu0 %v155
    %v302 = vpop.f32.mrb[0].mxu0
    %v303 = vadd.f32 0.0, %v302
    %v304 = vpop.f32.mrb[0].mxu0
    %305 = vdwg.mxu0
    %v307 = vsel %vm108, %v76, 0
    %v310 = vsel %vm108, %v77, 0
    %v313 = vsel %vm108, %v78, 0
    %v316 = vsel %vm108, %v79, 0
    %v319 = vsel %vm108, %v80, 0
    %v322 = vsel %vm108, %v81, 0
    %v325 = vsel %vm108, %v82, 0
    %v328 = vsel %vm108, %v83, 0
    %v331 = vsel %vm108, %v84, 0
    %v334 = vsel %vm108, %v85, 0
    %v337 = vsel %vm108, %v86, 0
    %v340 = vsel %vm108, %v87, 0
    %v343 = vsel %vm108, %v88, 0
    %v346 = vsel %vm108, %v89, 0
    %v349 = vsel %vm108, %v90, 0
    %v352 = vsel %vm108, %v91, 0
    %v355 = vsel %vm157, %v59, 0
    %357 = vmatprep.subr.mxu0 0.0
    %358 = vmatpush1.msra.mxu0 %v58
    %359 = vmatprep.subr.mxu0 0.0
    %360 = vmatpush1.msra.mxu0 %v355
    %361 = vmatprep.subr.mxu0 0.0
    %362 = vmatpush1.msra.mxu0 0.0
    %363 = vmatprep.subr.mxu0 0.0
    %364 = vmatpush1.msra.mxu0 0.0
    %365 = vmatprep.subr.mxu0 0.0
    %366 = vmatpush1.msra.mxu0 0.0
    %367 = vmatprep.subr.mxu0 0.0
    %368 = vmatpush1.msra.mxu0 0.0
    %369 = vmatprep.subr.mxu0 0.0
    %370 = vmatpush1.msra.mxu0 0.0
    %371 = vmatprep.subr.mxu0 0.0
    %372 = vmatpush1.msra.mxu0 0.0
    %373 = vmatprep.subr.mxu0 0.0
    %374 = vmatpush1.msra.mxu0 0.0
    %375 = vmatprep.subr.mxu0 0.0
    %376 = vmatpush1.msra.mxu0 0.0
    %377 = vmatprep.subr.mxu0 0.0
    %378 = vmatpush1.msra.mxu0 0.0
    %379 = vmatprep.subr.mxu0 0.0
    %380 = vmatpush1.msra.mxu0 0.0
    %381 = vmatprep.subr.mxu0 0.0
    %382 = vmatpush1.msra.mxu0 0.0
    %383 = vmatprep.subr.mxu0 0.0
    %384 = vmatpush1.msra.mxu0 0.0
    %385 = vmatprep.subr.mxu0 0.0
    %386 = vmatpush1.msra.mxu0 0.0
    %387 = vmatprep.subr.mxu0 0.0
    %388 = vmatpush1.msra.mxu0 0.0
    %389 = vmatprep.subr.mxu0 0.0
    %390 = vmatpush1.msra.mxu0 0.0
    %391 = vmatprep.subr.mxu0 0.0
    %392 = vmatpush1.msra.mxu0 0.0
    %393 = vmatprep.subr.mxu0 0.0
    %394 = vmatpush1.msra.mxu0 0.0
    %395 = vmatprep.subr.mxu0 0.0
    %396 = vmatpush1.msra.mxu0 0.0
    %397 = vmatprep.subr.mxu0 0.0
    %398 = vmatpush1.msra.mxu0 0.0
    %399 = vmatprep.subr.mxu0 0.0
    %400 = vmatpush1.msra.mxu0 0.0
    %401 = vmatprep.subr.mxu0 0.0
    %402 = vmatpush1.msra.mxu0 0.0
    %403 = vmatprep.subr.mxu0 0.0
    %404 = vmatpush1.msra.mxu0 0.0
    %405 = vmatprep.subr.mxu0 0.0
    %406 = vmatpush1.msra.mxu0 0.0
    %407 = vmatprep.subr.mxu0 0.0
    %408 = vmatpush1.msra.mxu0 0.0
    %409 = vmatprep.subr.mxu0 0.0
    %410 = vmatpush1.msra.mxu0 0.0
    %411 = vmatprep.subr.mxu0 0.0
    %412 = vmatpush1.msra.mxu0 0.0
    %413 = vmatprep.subr.mxu0 0.0
    %414 = vmatpush1.msra.mxu0 0.0
    %415 = vmatprep.subr.mxu0 0.0
    %416 = vmatpush1.msra.mxu0 0.0
    %417 = vmatprep.subr.mxu0 0.0
    %418 = vmatpush1.msra.mxu0 0.0
    %419 = vmatprep.subr.mxu0 0.0
    %420 = vmatpush1.msra.mxu0 0.0
    %421 = vmatprep.mubr.f32.mxu0 0.0
    %422 = vmatmul.mubr.f32.gmra.mrb[0].mxu0 %v307
    %v423 = vpop.f32.mrb[0].mxu0
    %v424 = vadd.f32 %v228, %v423
    %v425 = vpop.f32.mrb[0].mxu0
    %426 = vmatprep.mubr.f32.mxu0 0.0
    %427 = vmatmul.mubr.f32.gmra.mrb[0].mxu0 %v310
    %v428 = vpop.f32.mrb[0].mxu0
    %v429 = vadd.f32 %v233, %v428
    %v430 = vpop.f32.mrb[0].mxu0
    %431 = vmatprep.mubr.f32.mxu0 0.0
    %432 = vmatmul.mubr.f32.gmra.mrb[0].mxu0 %v313
    %v433 = vpop.f32.mrb[0].mxu0
    %v434 = vadd.f32 %v238, %v433
    %v435 = vpop.f32.mrb[0].mxu0
    %436 = vmatprep.mubr.f32.mxu0 0.0
    %437 = vmatmul.mubr.f32.gmra.mrb[0].mxu0 %v316
    %v438 = vpop.f32.mrb[0].mxu0
    %v439 = vadd.f32 %v243, %v438
    %v440 = vpop.f32.mrb[0].mxu0
    %441 = vmatprep.mubr.f32.mxu0 0.0
    %442 = vmatmul.mubr.f32.gmra.mrb[0].mxu0 %v319
    %v443 = vpop.f32.mrb[0].mxu0
    %v444 = vadd.f32 %v248, %v443
    %v445 = vpop.f32.mrb[0].mxu0
    %446 = vmatprep.mubr.f32.mxu0 0.0
    %447 = vmatmul.mubr.f32.gmra.mrb[0].mxu0 %v322
    %v448 = vpop.f32.mrb[0].mxu0
    %v449 = vadd.f32 %v253, %v448
    %v450 = vpop.f32.mrb[0].mxu0
    %451 = vmatprep.mubr.f32.mxu0 0.0
    %452 = vmatmul.mubr.f32.gmra.mrb[0].mxu0 %v325
    %v453 = vpop.f32.mrb[0].mxu0
    %v454 = vadd.f32 %v258, %v453
    %v455 = vpop.f32.mrb[0].mxu0
    %456 = vmatprep.mubr.f32.mxu0 0.0
    %457 = vmatmul.mubr.f32.gmra.mrb[0].mxu0 %v328
    %v458 = vpop.f32.mrb[0].mxu0
    %v459 = vadd.f32 %v263, %v458
    %v460 = vpop.f32.mrb[0].mxu0
    %461 = vmatprep.mubr.f32.mxu0 0.0
    %462 = vmatmul.mubr.f32.gmra.mrb[0].mxu0 %v331
    %v463 = vpop.f32.mrb[0].mxu0
    %v464 = vadd.f32 %v268, %v463
    %v465 = vpop.f32.mrb[0].mxu0
    %466 = vmatprep.mubr.f32.mxu0 0.0
    %467 = vmatmul.mubr.f32.gmra.mrb[0].mxu0 %v334
    %v468 = vpop.f32.mrb[0].mxu0
    %v469 = vadd.f32 %v273, %v468
    %v470 = vpop.f32.mrb[0].mxu0
    %471 = vmatprep.mubr.f32.mxu0 0.0
    %472 = vmatmul.mubr.f32.gmra.mrb[0].mxu0 %v337
    %v473 = vpop.f32.mrb[0].mxu0
    %v474 = vadd.f32 %v278, %v473
    %v475 = vpop.f32.mrb[0].mxu0
    %476 = vmatprep.mubr.f32.mxu0 0.0
    %477 = vmatmul.mubr.f32.gmra.mrb[0].mxu0 %v340
    %v478 = vpop.f32.mrb[0].mxu0
    %v479 = vadd.f32 %v283, %v478
    %v480 = vpop.f32.mrb[0].mxu0
    %481 = vmatprep.mubr.f32.mxu0 0.0
    %482 = vmatmul.mubr.f32.gmra.mrb[0].mxu0 %v343
    %v483 = vpop.f32.mrb[0].mxu0
    %v484 = vadd.f32 %v288, %v483
    %v485 = vpop.f32.mrb[0].mxu0
    %486 = vmatprep.mubr.f32.mxu0 0.0
    %487 = vmatmul.mubr.f32.gmra.mrb[0].mxu0 %v346
    %v488 = vpop.f32.mrb[0].mxu0
    %v489 = vadd.f32 %v293, %v488
    %v490 = vpop.f32.mrb[0].mxu0
    %491 = vmatprep.mubr.f32.mxu0 0.0
    %492 = vmatmul.mubr.f32.gmra.mrb[0].mxu0 %v349
    %v493 = vpop.f32.mrb[0].mxu0
    %v494 = vadd.f32 %v298, %v493
    %v495 = vpop.f32.mrb[0].mxu0
    %496 = vmatprep.mubr.f32.mxu0 0.0
    %497 = vmatmul.mubr.f32.gmra.mrb[0].mxu0 %v352
    %v498 = vpop.f32.mrb[0].mxu0
    %v499 = vadd.f32 %v303, %v498
    %v500 = vpop.f32.mrb[0].mxu0
    %501 = vdwg.mxu0
    %v502 = vld [vmem:[%s4] sm:$0xff]
    %v503 = vld [vmem:[%s4 + $0x8] sm:$0xff]
    %v504 = vld [vmem:[%s4 + $0x10] sm:$0xff]
    %v505 = vld [vmem:[%s4 + $0x18] sm:$0xff]
    %v506 = vld [vmem:[%s4 + $0x20] sm:$0xff]
    %v507 = vld [vmem:[%s4 + $0x28] sm:$0xff]
    %v508 = vld [vmem:[%s4 + $0x30] sm:$0xff]
    %v509 = vld [vmem:[%s4 + $0x38] sm:$0xff]
    %v510 = vld [vmem:[%s4 + $0x40] sm:$0xff]
    %v511 = vld [vmem:[%s4 + $0x48] sm:$0xff]
    %v512 = vld [vmem:[%s4 + $0x50] sm:$0xff]
    %v513 = vld [vmem:[%s4 + $0x58] sm:$0xff]
    %v514 = vld [vmem:[%s4 + $0x60] sm:$0xff]
    %v515 = vld [vmem:[%s4 + $0x68] sm:$0xff]
    %v516 = vld [vmem:[%s4 + $0x70] sm:$0xff]
    %v517 = vld [vmem:[%s4 + $0x78] sm:$0xff]
    %519 = vset.pattern.permute.xlu0 0
    %520 = vperm.xlu0 %519, %v502
    %v521 = vpop.permute.xlu0 %520
    %524 = vset.pattern.permute.xlu0 0
    %525 = vperm.xlu0 %524, %v503
    %v526 = vpop.permute.xlu0 %525
    %529 = vset.pattern.permute.xlu0 0
    %530 = vperm.xlu0 %529, %v504
    %v531 = vpop.permute.xlu0 %530
    %534 = vset.pattern.permute.xlu0 0
    %535 = vperm.xlu0 %534, %v505
    %v536 = vpop.permute.xlu0 %535
    %539 = vset.pattern.permute.xlu0 0
    %540 = vperm.xlu0 %539, %v506
    %v541 = vpop.permute.xlu0 %540
    %544 = vset.pattern.permute.xlu0 0
    %545 = vperm.xlu0 %544, %v507
    %v546 = vpop.permute.xlu0 %545
    %549 = vset.pattern.permute.xlu0 0
    %550 = vperm.xlu0 %549, %v508
    %v551 = vpop.permute.xlu0 %550
    %554 = vset.pattern.permute.xlu0 0
    %555 = vperm.xlu0 %554, %v509
    %v556 = vpop.permute.xlu0 %555
    %559 = vset.pattern.permute.xlu0 0
    %560 = vperm.xlu0 %559, %v510
    %v561 = vpop.permute.xlu0 %560
    %564 = vset.pattern.permute.xlu0 0
    %565 = vperm.xlu0 %564, %v511
    %v566 = vpop.permute.xlu0 %565
    %569 = vset.pattern.permute.xlu0 0
    %570 = vperm.xlu0 %569, %v512
    %v571 = vpop.permute.xlu0 %570
    %574 = vset.pattern.permute.xlu0 0
    %575 = vperm.xlu0 %574, %v513
    %v576 = vpop.permute.xlu0 %575
    %579 = vset.pattern.permute.xlu0 0
    %580 = vperm.xlu0 %579, %v514
    %v581 = vpop.permute.xlu0 %580
    %584 = vset.pattern.permute.xlu0 0
    %585 = vperm.xlu0 %584, %v515
    %v586 = vpop.permute.xlu0 %585
    %589 = vset.pattern.permute.xlu0 0
    %590 = vperm.xlu0 %589, %v516
    %v591 = vpop.permute.xlu0 %590
    %594 = vset.pattern.permute.xlu0 0
    %595 = vperm.xlu0 %594, %v517
    %v596 = vpop.permute.xlu0 %595
    %v598 = vadd.f32 %v424, %v521
    %v599 = vadd.f32 %v429, %v526
    %v600 = vadd.f32 %v434, %v531
    %v601 = vadd.f32 %v439, %v536
    %v602 = vadd.f32 %v444, %v541
    %v603 = vadd.f32 %v449, %v546
    %v604 = vadd.f32 %v454, %v551
    %v605 = vadd.f32 %v459, %v556
    %v606 = vadd.f32 %v464, %v561
    %v607 = vadd.f32 %v469, %v566
    %v608 = vadd.f32 %v474, %v571
    %v609 = vadd.f32 %v479, %v576
    %v610 = vadd.f32 %v484, %v581
    %v611 = vadd.f32 %v489, %v586
    %v612 = vadd.f32 %v494, %v591
    %v613 = vadd.f32 %v499, %v596
    %v614 = vmax.f32 %v598, 0.0
    %v615 = vmax.f32 %v599, 0.0
    %v616 = vmax.f32 %v600, 0.0
    %v617 = vmax.f32 %v601, 0.0
    %v618 = vmax.f32 %v602, 0.0
    %v619 = vmax.f32 %v603, 0.0
    %v620 = vmax.f32 %v604, 0.0
    %v621 = vmax.f32 %v605, 0.0
    %v622 = vmax.f32 %v606, 0.0
    %v623 = vmax.f32 %v607, 0.0
    %v624 = vmax.f32 %v608, 0.0
    %v625 = vmax.f32 %v609, 0.0
    %v626 = vmax.f32 %v610, 0.0
    %v627 = vmax.f32 %v611, 0.0
    %v628 = vmax.f32 %v612, 0.0
    %v629 = vmax.f32 %v613, 0.0
    %v630 = vld [vmem:[%s5] sm:$0xf]
    %v631 = vld [vmem:[%s6] sm:$0xf]
    %633 = vset.pattern.permute.xlu0 0
    %634 = vperm.xlu0 %633, %v631
    %v635 = vpop.permute.xlu0 %634
    %637 = vmatprep.subr.mxu0 0.0
    %638 = vmatpush1.msra.mxu0 %v614
    %639 = vmatprep.subr.mxu0 0.0
    %640 = vmatpush1.msra.mxu0 %v615
    %641 = vmatprep.subr.mxu0 0.0
    %642 = vmatpush1.msra.mxu0 %v616
    %643 = vmatprep.subr.mxu0 0.0
    %644 = vmatpush1.msra.mxu0 %v617
    %645 = vmatprep.subr.mxu0 0.0
    %646 = vmatpush1.msra.mxu0 %v618
    %647 = vmatprep.subr.mxu0 0.0
    %648 = vmatpush1.msra.mxu0 %v619
    %649 = vmatprep.subr.mxu0 0.0
    %650 = vmatpush1.msra.mxu0 %v620
    %651 = vmatprep.subr.mxu0 0.0
    %652 = vmatpush1.msra.mxu0 %v621
    %653 = vmatprep.subr.mxu0 0.0
    %654 = vmatpush1.msra.mxu0 %v622
    %655 = vmatprep.subr.mxu0 0.0
    %656 = vmatpush1.msra.mxu0 %v623
    %657 = vmatprep.subr.mxu0 0.0
    %658 = vmatpush1.msra.mxu0 %v624
    %659 = vmatprep.subr.mxu0 0.0
    %660 = vmatpush1.msra.mxu0 %v625
    %661 = vmatprep.subr.mxu0 0.0
    %662 = vmatpush1.msra.mxu0 %v626
    %663 = vmatprep.subr.mxu0 0.0
    %664 = vmatpush1.msra.mxu0 %v627
    %665 = vmatprep.subr.mxu0 0.0
    %666 = vmatpush1.msra.mxu0 %v628
    %667 = vmatprep.subr.mxu0 0.0
    %668 = vmatpush1.msra.mxu0 %v629
    %669 = vmatprep.subr.mxu0 0.0
    %670 = vmatpush1.msra.mxu0 0.0
    %671 = vmatprep.subr.mxu0 0.0
    %672 = vmatpush1.msra.mxu0 0.0
    %673 = vmatprep.subr.mxu0 0.0
    %674 = vmatpush1.msra.mxu0 0.0
    %675 = vmatprep.subr.mxu0 0.0
    %676 = vmatpush1.msra.mxu0 0.0
    %677 = vmatprep.subr.mxu0 0.0
    %678 = vmatpush1.msra.mxu0 0.0
    %679 = vmatprep.subr.mxu0 0.0
    %680 = vmatpush1.msra.mxu0 0.0
    %681 = vmatprep.subr.mxu0 0.0
    %682 = vmatpush1.msra.mxu0 0.0
    %683 = vmatprep.subr.mxu0 0.0
    %684 = vmatpush1.msra.mxu0 0.0
    %685 = vmatprep.subr.mxu0 0.0
    %686 = vmatpush1.msra.mxu0 0.0
    %687 = vmatprep.subr.mxu0 0.0
    %688 = vmatpush1.msra.mxu0 0.0
    %689 = vmatprep.subr.mxu0 0.0
    %690 = vmatpush1.msra.mxu0 0.0
    %691 = vmatprep.subr.mxu0 0.0
    %692 = vmatpush1.msra.mxu0 0.0
    %693 = vmatprep.subr.mxu0 0.0
    %694 = vmatpush1.msra.mxu0 0.0
    %695 = vmatprep.subr.mxu0 0.0
    %696 = vmatpush1.msra.mxu0 0.0
    %697 = vmatprep.subr.mxu0 0.0
    %698 = vmatpush1.msra.mxu0 0.0
    %699 = vmatprep.subr.mxu0 0.0
    %700 = vmatpush1.msra.mxu0 0.0
    %701 = vmatprep.mubr.f32.mxu0 0.0
    %702 = vmatmul.mubr.f32.gmra.mrb[0].mxu0 %v630
    %v703 = vpop.f32.mrb[0].mxu0
    %v704 = vadd.f32 %v635, %v703
    %v705 = vpop.f32.mrb[0].mxu0
    %706 = vdwg.mxu0
    %vm707 = vcmask 11264
    %708 = vst.msk [vmem:[%s7] sm:$0xf] %vm707, %v704
    // Predicated region
    $region34: #{net_forward.1} parent=1 // pred_check
      _
    $region35: #{net_forward.1} parent=1 // pred_check_branch
      %710 = sbr.rel (0) target = $region37
    $region36: #{net_forward.1} parent=1 // pred_region
      _
    $region37: #{net_forward.1} parent=1 // pred_fallthru
      _
    // Predicated region
    $region38: #{net_forward.1} parent=1 // pred_check
      _
    $region39: #{net_forward.1} parent=1 // pred_check_branch
      %712 = sbr.rel (0) target = $region41
    $region40: #{net_forward.1} parent=1 // pred_region
      _
    $region41: #{net_forward.1} parent=1 // pred_fallthru
      _
    %713 = vsyncpa [#allocation3], 1

</llo_original>
